<compile_context>
chip_gen: v6e
topology: v6e:2x2x1
jax: 0.10.0
libtpu: 0.0.40
codegen_flags: <defaults>
</compile_context>

<pallas_src>
import functools

import jax
import jax.numpy as jnp
from jax.experimental import pallas as pl
from jax.experimental.pallas import tpu as pltpu

EPS = 1e-5
PAD = 128            # lane-dense feature width (Fin/Fout padded to 128 lanes)


def fused_gcn_kernel(a_ref, x_ref, w_ref, v_ref, o_ref, *, fouts):
    """All GCN layers fused: (SAGEConv -> LayerNorm(graph) -> PReLU) x n_layers.

    a_ref : VMEM [N, N]                   mean-aggregation matrix
    x_ref : VMEM [N, PAD]                 zero-padded input features
    w_ref : VMEM [n_layers*2*PAD, PAD]    per layer: rows [0:PAD]=W_l, [PAD:2*PAD]=W_r
                                          (zero-padded past Fin rows / Fout cols)
    v_ref : VMEM [n_layers*4, PAD]        per layer rows: b, ln_w, ln_b, prelu_alpha
                                          (alpha broadcast across all 128 lanes)
    o_ref : VMEM [N, PAD]                 lane-dense output (real cols = Fout_last)
    """
    pad = w_ref.shape[1]
    a = a_ref[...]
    x = x_ref[...]
    n = a.shape[0]

    vecs = v_ref[...]                      # [n_layers*4, 128] -- one vreg-sized load

    for l, fout in enumerate(fouts):
        w_l = w_ref[(2 * l) * pad:(2 * l + 1) * pad, :]       # [128, 128]
        w_r = w_ref[(2 * l + 1) * pad:(2 * l + 2) * pad, :]   # [128, 128]
        b     = vecs[4 * l + 0:4 * l + 1, :]                  # [1, 128]
        ln_w  = vecs[4 * l + 1:4 * l + 2, :]
        ln_b  = vecs[4 * l + 2:4 * l + 3, :]
        alpha = vecs[4 * l + 3:4 * l + 4, :]

        # --- SAGEConv (mean aggr): two accumulated K=128 dots, no concat ------
        agg = jnp.dot(a, x, preferred_element_type=jnp.float32)          # [N, PAD]
        h = (jnp.dot(agg, w_l, preferred_element_type=jnp.float32)
             + jnp.dot(x, w_r, preferred_element_type=jnp.float32)
             + b)                                   # padded lanes stay exactly 0

        # --- PyG LayerNorm, mode='graph' --------------------------------------
        # Padded lanes of h are exactly zero, so unmasked sums are exact.
        # s1 / s2 are independent XLU reductions (no mu -> var serial chain).
        inv_cnt = 1.0 / float(n * fout)
        s1 = jnp.sum(h)
        s2 = jnp.sum(h * h)
        mu = s1 * inv_cnt
        var = s2 * inv_cnt - mu * mu
        inv_std = 1.0 / (jnp.sqrt(var) + EPS)       # x / (std + eps), PyG graph mode
        h = (h - mu) * inv_std
        h = h * ln_w + ln_b                         # zero-padded ln_w/ln_b re-zero pads

        # --- PReLU (per-layer slope, broadcast row) ---------------------------
        x = jnp.where(h > 0.0, h, alpha * h)

    o_ref[...] = x                                  # single lane-dense [N, PAD] store


@functools.partial(jax.jit, static_argnames=("fouts",))
def gcn_forward(x, a_mean, w_stack, v_stack, fouts):
    """Hot path: pad x, launch the single fused pallas_call, slice real cols."""
    n, fin = x.shape
    x_pad = jnp.pad(x, ((0, 0), (0, PAD - fin)))

    vmem = pl.BlockSpec(memory_space=pltpu.MemorySpace.VMEM)
    out = pl.pallas_call(
        functools.partial(fused_gcn_kernel, fouts=fouts),
        out_shape=jax.ShapeDtypeStruct((n, PAD), jnp.float32),
        in_specs=[vmem, vmem, vmem, vmem],
        out_specs=vmem,
    )(a_mean, x_pad, w_stack, v_stack)

    # Small hand-off slice; skip it if the padded [N, 128] slab is acceptable.
    return out[:, :fouts[-1]]


def pack_gcn_params(params, pad=PAD):
    """One-time setup: pack/pad all layer params into two VMEM-friendly arrays."""
    n_layers = len(params)
    fouts = tuple(p["w_l"].shape[1] for p in params)

    w_stack = jnp.zeros((n_layers * 2 * pad, pad), jnp.float32)
    v_stack = jnp.zeros((n_layers * 4, pad), jnp.float32)
    for l, p in enumerate(params):
        fin, fout = p["w_l"].shape
        r = 2 * l * pad
        w_stack = w_stack.at[r:r + fin, :fout].set(p["w_l"])              # lin_l
        w_stack = w_stack.at[r + pad:r + pad + fin, :fout].set(p["w_r"])  # lin_r
        v_stack = v_stack.at[4 * l + 0, :fout].set(p["b_l"][0])
        v_stack = v_stack.at[4 * l + 1, :fout].set(p["ln_w"][0])
        v_stack = v_stack.at[4 * l + 2, :fout].set(p["ln_b"][0])
        v_stack = v_stack.at[4 * l + 3, :].set(p["prelu_a"][0, 0])        # bcast slope
    return w_stack, v_stack, fouts


def build_mean_adjacency(edge_index, n_nodes):
    """Dense mean-aggregation operator (MXU-friendly one-hot matmul, no scatter).

    A[i, j] = (#edges j->i) / max(in_degree(i), 1)   (scatter-mean semantics)
    Built ONCE at setup for a static graph (hoisted out of the forward path).
    """
    src = edge_index[0]
    dst = edge_index[1]
    src_oh = jax.nn.one_hot(src, n_nodes, dtype=jnp.float32)   # [E, N]
    dst_oh = jax.nn.one_hot(dst, n_nodes, dtype=jnp.float32)   # [E, N]
    counts = dst_oh.T @ src_oh                                 # [N, N]
    deg = counts.sum(axis=1, keepdims=True)
    return counts / jnp.maximum(deg, 1.0)


def init_gcn_params(key, layer_sizes):
    """Deterministic parameter init (shapes match SAGEConv/LayerNorm/PReLU)."""
    params = []
    for fin, fout in zip(layer_sizes[:-1], layer_sizes[1:]):
        key, k1, k2, k3 = jax.random.split(key, 4)
        bound = 1.0 / jnp.sqrt(fin)
        params.append(dict(
            w_l=jax.random.uniform(k1, (fin, fout), jnp.float32, -bound, bound),
            b_l=jax.random.uniform(k2, (1, fout), jnp.float32, -bound, bound),
            w_r=jax.random.uniform(k3, (fin, fout), jnp.float32, -bound, bound),
            ln_w=jnp.ones((1, fout), jnp.float32),
            ln_b=jnp.zeros((1, fout), jnp.float32),
            prelu_a=jnp.full((1, 1), 0.25, jnp.float32),
        ))
    return params


def gcn_reference(x, edge_index, params, n_nodes):
    """Pure-JAX reference of the same forward pass (unpadded, two-pass LN)."""
    a_mean = build_mean_adjacency(edge_index, n_nodes)
    for p in params:
        h = a_mean @ x @ p["w_l"] + p["b_l"] + x @ p["w_r"]
        mu = jnp.mean(h)
        hc = h - mu
        h = hc / (jnp.sqrt(jnp.mean(hc * hc)) + EPS)
        h = h * p["ln_w"] + p["ln_b"]
        x = jnp.where(h > 0, h, p["prelu_a"][0, 0] * h)
    return x


if __name__ == "__main__":
    N_NODES = 64
    N_EDGES = 256
    LAYER_SIZES = [16, 32, 32]

    key = jax.random.PRNGKey(0)
    kx, ke_src, ke_dst, kp = jax.random.split(key, 4)

    x = jax.random.normal(kx, (N_NODES, LAYER_SIZES[0]), jnp.float32)
    edge_index = jnp.stack([
        jax.random.randint(ke_src, (N_EDGES,), 0, N_NODES),
        jax.random.randint(ke_dst, (N_EDGES,), 0, N_NODES),
    ]).astype(jnp.int32)

    params = init_gcn_params(kp, LAYER_SIZES)

    # ---- one-time setup (hoisted out of the per-forward hot path) ----------
    a_mean = jax.block_until_ready(build_mean_adjacency(edge_index, N_NODES))
    w_stack, v_stack, fouts = pack_gcn_params(params)
    w_stack = jax.block_until_ready(w_stack)
    v_stack = jax.block_until_ready(v_stack)

    # ---- forward ------------------------------------------------------------
    out = gcn_forward(x, a_mean, w_stack, v_stack, fouts)
    out = jax.block_until_ready(out)

    ref = gcn_reference(x, edge_index, params, N_NODES)
    assert out.shape == (N_NODES, LAYER_SIZES[-1])
    assert jnp.allclose(out, ref, atol=1e-4, rtol=1e-4)

    print("KERNEL_OK")
</pallas_src>

<mosaic_0001>
module attributes {stable_mosaic.version = 11 : i64} {
  func.func @fused_gcn_kernel(%arg0: memref<64x64xf32, #tpu.memory_space<vmem>>, %arg1: memref<64x128xf32, #tpu.memory_space<vmem>>, %arg2: memref<512x128xf32, #tpu.memory_space<vmem>>, %arg3: memref<8x128xf32, #tpu.memory_space<vmem>>, %arg4: memref<64x128xf32, #tpu.memory_space<vmem>>) attributes {dimension_semantics = [], scalar_prefetch = 0 : i64, scratch_operands = 0 : i64, tpu.core_type = #tpu.core_type<tc>} {
    %c0 = arith.constant 0 : index
    %c0_0 = arith.constant 0 : index
    %0 = vector.load %arg0[%c0, %c0_0] : memref<64x64xf32, #tpu.memory_space<vmem>>, vector<64x64xf32>
    %c0_1 = arith.constant 0 : index
    %c0_2 = arith.constant 0 : index
    %1 = vector.load %arg1[%c0_1, %c0_2] : memref<64x128xf32, #tpu.memory_space<vmem>>, vector<64x128xf32>
    %c0_3 = arith.constant 0 : index
    %c0_4 = arith.constant 0 : index
    %2 = vector.load %arg3[%c0_3, %c0_4] : memref<8x128xf32, #tpu.memory_space<vmem>>, vector<8x128xf32>
    %c0_5 = arith.constant 0 : index
    %c0_6 = arith.constant 0 : index
    %3 = vector.load %arg2[%c0_5, %c0_6] : memref<512x128xf32, #tpu.memory_space<vmem>>, vector<128x128xf32>
    %c128 = arith.constant 128 : index
    %c0_7 = arith.constant 0 : index
    %4 = vector.load %arg2[%c128, %c0_7] : memref<512x128xf32, #tpu.memory_space<vmem>>, vector<128x128xf32>
    %5 = vector.extract_strided_slice %2 {offsets = [0, 0], sizes = [1, 128], strides = [1, 1]} : vector<8x128xf32> to vector<1x128xf32>
    %6 = vector.extract_strided_slice %2 {offsets = [1, 0], sizes = [1, 128], strides = [1, 1]} : vector<8x128xf32> to vector<1x128xf32>
    %7 = vector.extract_strided_slice %2 {offsets = [2, 0], sizes = [1, 128], strides = [1, 1]} : vector<8x128xf32> to vector<1x128xf32>
    %8 = vector.extract_strided_slice %2 {offsets = [3, 0], sizes = [1, 128], strides = [1, 1]} : vector<8x128xf32> to vector<1x128xf32>
    %cst = arith.constant dense<0.000000e+00> : vector<64x128xf32>
    %9 = tpu.matmul %0, %1, %cst {dimension_numbers = #tpu.dot_dimension_numbers<[1], [0], [0], [1], [0, 0, 1, 1], [], []>} : vector<64x64xf32>, vector<64x128xf32>, vector<64x128xf32> -> vector<64x128xf32>
    %cst_8 = arith.constant dense<0.000000e+00> : vector<64x128xf32>
    %10 = tpu.matmul %9, %3, %cst_8 {dimension_numbers = #tpu.dot_dimension_numbers<[1], [0], [0], [1], [0, 0, 1, 1], [], []>} : vector<64x128xf32>, vector<128x128xf32>, vector<64x128xf32> -> vector<64x128xf32>
    %cst_9 = arith.constant dense<0.000000e+00> : vector<64x128xf32>
    %11 = tpu.matmul %1, %4, %cst_9 {dimension_numbers = #tpu.dot_dimension_numbers<[1], [0], [0], [1], [0, 0, 1, 1], [], []>} : vector<64x128xf32>, vector<128x128xf32>, vector<64x128xf32> -> vector<64x128xf32>
    %12 = arith.addf %10, %11 : vector<64x128xf32>
    %13 = vector.broadcast %5 : vector<1x128xf32> to vector<64x128xf32>
    %14 = arith.addf %12, %13 : vector<64x128xf32>
    %15 = vector.shape_cast %14 : vector<64x128xf32> to vector<1x64x128xf32>
    %cst_10 = arith.constant dense<0.000000e+00> : vector<1xf32>
    %16 = vector.multi_reduction <add>, %15, %cst_10 [1, 2] : vector<1x64x128xf32> to vector<1xf32>
    %17 = vector.shape_cast %16 : vector<1xf32> to vector<1x1x1xf32>
    %18 = vector.extract %17[0, 0, 0] : f32 from vector<1x1x1xf32>
    %19 = arith.mulf %14, %14 : vector<64x128xf32>
    %20 = vector.shape_cast %19 : vector<64x128xf32> to vector<1x64x128xf32>
    %cst_11 = arith.constant dense<0.000000e+00> : vector<1xf32>
    %21 = vector.multi_reduction <add>, %20, %cst_11 [1, 2] : vector<1x64x128xf32> to vector<1xf32>
    %22 = vector.shape_cast %21 : vector<1xf32> to vector<1x1x1xf32>
    %23 = vector.extract %22[0, 0, 0] : f32 from vector<1x1x1xf32>
    %cst_12 = arith.constant 4.8828125E-4 : f32
    %24 = arith.mulf %18, %cst_12 : f32
    %cst_13 = arith.constant 4.8828125E-4 : f32
    %25 = arith.mulf %23, %cst_13 : f32
    %26 = arith.mulf %24, %24 : f32
    %27 = arith.subf %25, %26 : f32
    %28 = math.sqrt %27 : f32
    %cst_14 = arith.constant 9.99999974E-6 : f32
    %29 = arith.addf %28, %cst_14 : f32
    %cst_15 = arith.constant 1.000000e+00 : f32
    %30 = arith.divf %cst_15, %29 : f32
    %31 = vector.broadcast %24 : f32 to vector<64x128xf32>
    %32 = arith.subf %14, %31 : vector<64x128xf32>
    %33 = vector.broadcast %30 : f32 to vector<64x128xf32>
    %34 = arith.mulf %32, %33 : vector<64x128xf32>
    %35 = vector.broadcast %6 : vector<1x128xf32> to vector<64x128xf32>
    %36 = arith.mulf %34, %35 : vector<64x128xf32>
    %37 = vector.broadcast %7 : vector<1x128xf32> to vector<64x128xf32>
    %38 = arith.addf %36, %37 : vector<64x128xf32>
    %cst_16 = arith.constant 0.000000e+00 : f32
    %39 = vector.broadcast %cst_16 : f32 to vector<64x128xf32>
    %40 = arith.cmpf ogt, %38, %39 : vector<64x128xf32>
    %41 = vector.broadcast %8 : vector<1x128xf32> to vector<64x128xf32>
    %42 = arith.mulf %41, %38 : vector<64x128xf32>
    %43 = arith.select %40, %38, %42 : vector<64x128xi1>, vector<64x128xf32>
    %c256 = arith.constant 256 : index
    %c0_17 = arith.constant 0 : index
    %44 = vector.load %arg2[%c256, %c0_17] : memref<512x128xf32, #tpu.memory_space<vmem>>, vector<128x128xf32>
    %c384 = arith.constant 384 : index
    %c0_18 = arith.constant 0 : index
    %45 = vector.load %arg2[%c384, %c0_18] : memref<512x128xf32, #tpu.memory_space<vmem>>, vector<128x128xf32>
    %46 = vector.extract_strided_slice %2 {offsets = [4, 0], sizes = [1, 128], strides = [1, 1]} : vector<8x128xf32> to vector<1x128xf32>
    %47 = vector.extract_strided_slice %2 {offsets = [5, 0], sizes = [1, 128], strides = [1, 1]} : vector<8x128xf32> to vector<1x128xf32>
    %48 = vector.extract_strided_slice %2 {offsets = [6, 0], sizes = [1, 128], strides = [1, 1]} : vector<8x128xf32> to vector<1x128xf32>
    %49 = vector.extract_strided_slice %2 {offsets = [7, 0], sizes = [1, 128], strides = [1, 1]} : vector<8x128xf32> to vector<1x128xf32>
    %cst_19 = arith.constant dense<0.000000e+00> : vector<64x128xf32>
    %50 = tpu.matmul %0, %43, %cst_19 {dimension_numbers = #tpu.dot_dimension_numbers<[1], [0], [0], [1], [0, 0, 1, 1], [], []>} : vector<64x64xf32>, vector<64x128xf32>, vector<64x128xf32> -> vector<64x128xf32>
    %cst_20 = arith.constant dense<0.000000e+00> : vector<64x128xf32>
    %51 = tpu.matmul %50, %44, %cst_20 {dimension_numbers = #tpu.dot_dimension_numbers<[1], [0], [0], [1], [0, 0, 1, 1], [], []>} : vector<64x128xf32>, vector<128x128xf32>, vector<64x128xf32> -> vector<64x128xf32>
    %cst_21 = arith.constant dense<0.000000e+00> : vector<64x128xf32>
    %52 = tpu.matmul %43, %45, %cst_21 {dimension_numbers = #tpu.dot_dimension_numbers<[1], [0], [0], [1], [0, 0, 1, 1], [], []>} : vector<64x128xf32>, vector<128x128xf32>, vector<64x128xf32> -> vector<64x128xf32>
    %53 = arith.addf %51, %52 : vector<64x128xf32>
    %54 = vector.broadcast %46 : vector<1x128xf32> to vector<64x128xf32>
    %55 = arith.addf %53, %54 : vector<64x128xf32>
    %56 = vector.shape_cast %55 : vector<64x128xf32> to vector<1x64x128xf32>
    %cst_22 = arith.constant dense<0.000000e+00> : vector<1xf32>
    %57 = vector.multi_reduction <add>, %56, %cst_22 [1, 2] : vector<1x64x128xf32> to vector<1xf32>
    %58 = vector.shape_cast %57 : vector<1xf32> to vector<1x1x1xf32>
    %59 = vector.extract %58[0, 0, 0] : f32 from vector<1x1x1xf32>
    %60 = arith.mulf %55, %55 : vector<64x128xf32>
    %61 = vector.shape_cast %60 : vector<64x128xf32> to vector<1x64x128xf32>
    %cst_23 = arith.constant dense<0.000000e+00> : vector<1xf32>
    %62 = vector.multi_reduction <add>, %61, %cst_23 [1, 2] : vector<1x64x128xf32> to vector<1xf32>
    %63 = vector.shape_cast %62 : vector<1xf32> to vector<1x1x1xf32>
    %64 = vector.extract %63[0, 0, 0] : f32 from vector<1x1x1xf32>
    %cst_24 = arith.constant 4.8828125E-4 : f32
    %65 = arith.mulf %59, %cst_24 : f32
    %cst_25 = arith.constant 4.8828125E-4 : f32
    %66 = arith.mulf %64, %cst_25 : f32
    %67 = arith.mulf %65, %65 : f32
    %68 = arith.subf %66, %67 : f32
    %69 = math.sqrt %68 : f32
    %cst_26 = arith.constant 9.99999974E-6 : f32
    %70 = arith.addf %69, %cst_26 : f32
    %cst_27 = arith.constant 1.000000e+00 : f32
    %71 = arith.divf %cst_27, %70 : f32
    %72 = vector.broadcast %65 : f32 to vector<64x128xf32>
    %73 = arith.subf %55, %72 : vector<64x128xf32>
    %74 = vector.broadcast %71 : f32 to vector<64x128xf32>
    %75 = arith.mulf %73, %74 : vector<64x128xf32>
    %76 = vector.broadcast %47 : vector<1x128xf32> to vector<64x128xf32>
    %77 = arith.mulf %75, %76 : vector<64x128xf32>
    %78 = vector.broadcast %48 : vector<1x128xf32> to vector<64x128xf32>
    %79 = arith.addf %77, %78 : vector<64x128xf32>
    %cst_28 = arith.constant 0.000000e+00 : f32
    %80 = vector.broadcast %cst_28 : f32 to vector<64x128xf32>
    %81 = arith.cmpf ogt, %79, %80 : vector<64x128xf32>
    %82 = vector.broadcast %49 : vector<1x128xf32> to vector<64x128xf32>
    %83 = arith.mulf %82, %79 : vector<64x128xf32>
    %84 = arith.select %81, %79, %83 : vector<64x128xi1>, vector<64x128xf32>
    %c0_29 = arith.constant 0 : index
    %c0_30 = arith.constant 0 : index
    %85 = vector.load %arg4[%c0_29, %c0_30] : memref<64x128xf32, #tpu.memory_space<vmem>>, vector<64x128xf32>
    tpu.vector_store %arg4[%c0_29, %c0_30], %84 {strides = array<i32>} : memref<64x128xf32, #tpu.memory_space<vmem>>, vector<64x128xf32>,
    return
  }
}

</mosaic_0001>

<llo_original>
// kernel: gcn_forward.1
$region0: #{gcn_forward.1}
  #allocation0 [shape = 'u32[]', space=smem, size = 0x4, offset = 0x4, fixed_abs, tag = 'smem constant byte address 0x4 - core index']
  #allocation1 [shape = 'u32[144,128]{1,0:T(1,128)}', space=vmem, size = 0x12000, scoped, tag = 'internal scratch']
  %s0 = inlined_call_operand.vmem [shape: f32[64,64], index: 0, kind: input, shape index: {}]
  %s1 = inlined_call_operand.vmem [shape: f32[64,128], index: 1, kind: input, shape index: {}]
  %s2 = inlined_call_operand.hbm [shape: f32[512,128], index: 2, kind: input, shape index: {}]
  %s3 = inlined_call_operand.vmem [shape: f32[8,128], index: 3, kind: input, shape index: {}]
  %s4 = inlined_call_operand.vmem [shape: f32[64,128], index: 4, kind: output, shape index: {}]
  %s5 = sld [smem:[#allocation0]]
  $region30: #{gcn_forward.1} parent=0
    _
  %s7 = ssub.s32 1, %s5
  %s8 = scalar_select 0, %s7, %s5
  $region1: #{gcn_forward.1} parent=0
    #allocation2 [shape = 'u8[262144]{0}', space=vmem, size = 0x40000, scoped, tag = 'input window, operand 2, single buffered']
    #allocation3 [shape = 's32[1]{0}', space=sflag, size = 0x4, scoped, tag = 'scoped memory for gcn_forward.1']
    %9 = vsyncpa [#allocation3], 0
    // Predicated region
    $region2: #{gcn_forward.1} parent=1 // pred_check
      _
    $region3: #{gcn_forward.1} parent=1 // pred_check_branch
      %11 = sbr.rel (0) target = $region5
    $region4: #{gcn_forward.1} parent=1 // pred_region
      _
    $region5: #{gcn_forward.1} parent=1 // pred_fallthru
      _
    // Predicated region
    $region6: #{gcn_forward.1} parent=1 // pred_check
      _
    $region7: #{gcn_forward.1} parent=1 // pred_check_branch
      %13 = sbr.rel (0) target = $region9
    $region8: #{gcn_forward.1} parent=1 // pred_region
      _
    $region9: #{gcn_forward.1} parent=1 // pred_fallthru
      _
    // Predicated region
    $region10: #{gcn_forward.1} parent=1 // pred_check
      _
    $region11: #{gcn_forward.1} parent=1 // pred_check_branch
      %15 = sbr.rel (0) target = $region13
    $region12: #{gcn_forward.1} parent=1 // pred_region
      %s17 = ssub.s32 8192, 8192
      %18 = vsyncadd [#allocation3], %s17
      %s19 = sshll.u32 [#allocation2], 4
      %s20 = int_to_ptr.vmem [resolvable:$true] %s19
      %25 = dma.hbm_to_vmem [thread:$0]  %s2, 8192, %s20, [#allocation3], 128, 128, 8
    $region13: #{gcn_forward.1} parent=1 // pred_fallthru
      _
    // Predicated region
    $region14: #{gcn_forward.1} parent=1 // pred_check
      _
    $region15: #{gcn_forward.1} parent=1 // pred_check_branch
      %27 = sbr.rel (0) target = $region17
    $region16: #{gcn_forward.1} parent=1 // pred_region
      _
    $region17: #{gcn_forward.1} parent=1 // pred_fallthru
      _
    // Predicated region
    $region18: #{gcn_forward.1} parent=1 // pred_check
      _
    $region19: #{gcn_forward.1} parent=1 // pred_check_branch
      %29 = sbr.rel (0) target = $region21
    $region20: #{gcn_forward.1} parent=1 // pred_region
      %30 = dma.done [#allocation3], 8192
    $region21: #{gcn_forward.1} parent=1 // pred_fallthru
      _
    %v31 = vld [vmem:[%s0] sm:$0xff]
    %v32 = vld [vmem:[%s0 + $0x8] sm:$0xff]
    %v33 = vld [vmem:[%s0 + $0x10] sm:$0xff]
    %v34 = vld [vmem:[%s0 + $0x18] sm:$0xff]
    %v35 = vld [vmem:[%s0 + $0x20] sm:$0xff]
    %v36 = vld [vmem:[%s0 + $0x28] sm:$0xff]
    %v37 = vld [vmem:[%s0 + $0x30] sm:$0xff]
    %v38 = vld [vmem:[%s0 + $0x38] sm:$0xff]
    %v39 = vld [vmem:[%s1] sm:$0xff]
    %v40 = vld [vmem:[%s1 + $0x8] sm:$0xff]
    %v41 = vld [vmem:[%s1 + $0x10] sm:$0xff]
    %v42 = vld [vmem:[%s1 + $0x18] sm:$0xff]
    %v43 = vld [vmem:[%s1 + $0x20] sm:$0xff]
    %v44 = vld [vmem:[%s1 + $0x28] sm:$0xff]
    %v45 = vld [vmem:[%s1 + $0x30] sm:$0xff]
    %v46 = vld [vmem:[%s1 + $0x38] sm:$0xff]
    %v47 = vld [vmem:[%s3] sm:$0xff]
    %v48 = vld [vmem:[#allocation2] sm:$0xff]
    %v49 = vld [vmem:[#allocation2 + $0x8] sm:$0xff]
    %v50 = vld [vmem:[#allocation2 + $0x10] sm:$0xff]
    %v51 = vld [vmem:[#allocation2 + $0x18] sm:$0xff]
    %v52 = vld [vmem:[#allocation2 + $0x20] sm:$0xff]
    %v53 = vld [vmem:[#allocation2 + $0x28] sm:$0xff]
    %v54 = vld [vmem:[#allocation2 + $0x30] sm:$0xff]
    %v55 = vld [vmem:[#allocation2 + $0x38] sm:$0xff]
    %v56 = vld [vmem:[#allocation2 + $0x40] sm:$0xff]
    %v57 = vld [vmem:[#allocation2 + $0x48] sm:$0xff]
    %v58 = vld [vmem:[#allocation2 + $0x50] sm:$0xff]
    %v59 = vld [vmem:[#allocation2 + $0x58] sm:$0xff]
    %v60 = vld [vmem:[#allocation2 + $0x60] sm:$0xff]
    %v61 = vld [vmem:[#allocation2 + $0x68] sm:$0xff]
    %v62 = vld [vmem:[#allocation2 + $0x70] sm:$0xff]
    %v63 = vld [vmem:[#allocation2 + $0x78] sm:$0xff]
    %v64 = vld [vmem:[#allocation2 + $0x80] sm:$0xff]
    %v65 = vld [vmem:[#allocation2 + $0x88] sm:$0xff]
    %v66 = vld [vmem:[#allocation2 + $0x90] sm:$0xff]
    %v67 = vld [vmem:[#allocation2 + $0x98] sm:$0xff]
    %v68 = vld [vmem:[#allocation2 + $0xa0] sm:$0xff]
    %v69 = vld [vmem:[#allocation2 + $0xa8] sm:$0xff]
    %v70 = vld [vmem:[#allocation2 + $0xb0] sm:$0xff]
    %v71 = vld [vmem:[#allocation2 + $0xb8] sm:$0xff]
    %v72 = vld [vmem:[#allocation2 + $0xc0] sm:$0xff]
    %v73 = vld [vmem:[#allocation2 + $0xc8] sm:$0xff]
    %v74 = vld [vmem:[#allocation2 + $0xd0] sm:$0xff]
    %v75 = vld [vmem:[#allocation2 + $0xd8] sm:$0xff]
    %v76 = vld [vmem:[#allocation2 + $0xe0] sm:$0xff]
    %v77 = vld [vmem:[#allocation2 + $0xe8] sm:$0xff]
    %v78 = vld [vmem:[#allocation2 + $0xf0] sm:$0xff]
    %v79 = vld [vmem:[#allocation2 + $0xf8] sm:$0xff]
    %vm80 = vcmask 523264
    %v82 = vsel %vm80, %v31, 0
    %v85 = vsel %vm80, %v32, 0
    %v88 = vsel %vm80, %v33, 0
    %v91 = vsel %vm80, %v34, 0
    %v94 = vsel %vm80, %v35, 0
    %v97 = vsel %vm80, %v36, 0
    %v100 = vsel %vm80, %v37, 0
    %v103 = vsel %vm80, %v38, 0
    %105 = vmatprep.subr.mxu0 0.0
    %106 = vmatpush1.msra.mxu0 0.0
    %107 = vmatprep.subr.mxu0 0.0
    %108 = vmatpush1.msra.mxu0 0.0
    %109 = vmatprep.subr.mxu0 0.0
    %110 = vmatpush1.msra.mxu0 0.0
    %111 = vmatprep.subr.mxu0 0.0
    %112 = vmatpush1.msra.mxu0 0.0
    %113 = vmatprep.subr.mxu0 0.0
    %114 = vmatpush1.msra.mxu0 0.0
    %115 = vmatprep.subr.mxu0 0.0
    %116 = vmatpush1.msra.mxu0 0.0
    %117 = vmatprep.subr.mxu0 0.0
    %118 = vmatpush1.msra.mxu0 0.0
    %119 = vmatprep.subr.mxu0 0.0
    %120 = vmatpush1.msra.mxu0 0.0
    %121 = vmatprep.subr.mxu0 0.0
    %122 = vmatpush1.msra.mxu0 %v46
    %123 = vmatprep.subr.mxu0 0.0
    %124 = vmatpush1.msra.mxu0 %v45
    %125 = vmatprep.subr.mxu0 0.0
    %126 = vmatpush1.msra.mxu0 %v44
    %127 = vmatprep.subr.mxu0 0.0
    %128 = vmatpush1.msra.mxu0 %v43
    %129 = vmatprep.subr.mxu0 0.0
    %130 = vmatpush1.msra.mxu0 %v42
    %131 = vmatprep.subr.mxu0 0.0
    %132 = vmatpush1.msra.mxu0 %v41
    %133 = vmatprep.subr.mxu0 0.0
    %134 = vmatpush1.msra.mxu0 %v40
    %135 = vmatprep.subr.mxu0 0.0
    %136 = vmatpush1.msra.mxu0 %v39
    %137 = vmatprep.subr.mxu0 0.0
    %138 = vmatpush2.msra.mxu0 0.0
    %139 = vmatprep.subr.mxu0 0.0
    %140 = vmatpush2.msra.mxu0 0.0
    %141 = vmatprep.subr.mxu0 0.0
    %142 = vmatpush2.msra.mxu0 0.0
    %143 = vmatprep.subr.mxu0 0.0
    %144 = vmatpush2.msra.mxu0 0.0
    %145 = vmatprep.subr.mxu0 0.0
    %146 = vmatpush2.msra.mxu0 0.0
    %147 = vmatprep.subr.mxu0 0.0
    %148 = vmatpush2.msra.mxu0 0.0
    %149 = vmatprep.subr.mxu0 0.0
    %150 = vmatpush2.msra.mxu0 0.0
    %151 = vmatprep.subr.mxu0 0.0
    %152 = vmatpush2.msra.mxu0 0.0
    %153 = vmatprep.subr.mxu0 0.0
    %154 = vmatpush2.msra.mxu0 0.0
    %155 = vmatprep.subr.mxu0 0.0
    %156 = vmatpush2.msra.mxu0 0.0
    %157 = vmatprep.subr.mxu0 0.0
    %158 = vmatpush2.msra.mxu0 0.0
    %159 = vmatprep.subr.mxu0 0.0
    %160 = vmatpush2.msra.mxu0 0.0
    %161 = vmatprep.subr.mxu0 0.0
    %162 = vmatpush2.msra.mxu0 0.0
    %163 = vmatprep.subr.mxu0 0.0
    %164 = vmatpush2.msra.mxu0 0.0
    %165 = vmatprep.subr.mxu0 0.0
    %166 = vmatpush2.msra.mxu0 0.0
    %167 = vmatprep.subr.mxu0 0.0
    %168 = vmatpush2.msra.mxu0 0.0
    %169 = vmatprep.mubr.f32.mxu0 0.0
    %170 = vmatmul.mubr.f32.gmra.mxu0 %v82
    %v171 = vpop.f32.mrf.mxu0
    %v172 = vadd.f32 0.0, %v171
    %v173 = vpop.f32.mrf.mxu0
    %174 = vmatprep.mubr.f32.mxu0 0.0
    %175 = vmatmul.mubr.f32.gmra.mxu0 %v85
    %v176 = vpop.f32.mrf.mxu0
    %v177 = vadd.f32 0.0, %v176
    %v178 = vpop.f32.mrf.mxu0
    %179 = vmatprep.mubr.f32.mxu0 0.0
    %180 = vmatmul.mubr.f32.gmra.mxu0 %v88
    %v181 = vpop.f32.mrf.mxu0
    %v182 = vadd.f32 0.0, %v181
    %v183 = vpop.f32.mrf.mxu0
    %184 = vmatprep.mubr.f32.mxu0 0.0
    %185 = vmatmul.mubr.f32.gmra.mxu0 %v91
    %v186 = vpop.f32.mrf.mxu0
    %v187 = vadd.f32 0.0, %v186
    %v188 = vpop.f32.mrf.mxu0
    %189 = vmatprep.mubr.f32.mxu0 0.0
    %190 = vmatmul.mubr.f32.gmra.mxu0 %v94
    %v191 = vpop.f32.mrf.mxu0
    %v192 = vadd.f32 0.0, %v191
    %v193 = vpop.f32.mrf.mxu0
    %194 = vmatprep.mubr.f32.mxu0 0.0
    %195 = vmatmul.mubr.f32.gmra.mxu0 %v97
    %v196 = vpop.f32.mrf.mxu0
    %v197 = vadd.f32 0.0, %v196
    %v198 = vpop.f32.mrf.mxu0
    %199 = vmatprep.mubr.f32.mxu0 0.0
    %200 = vmatmul.mubr.f32.gmra.mxu0 %v100
    %v201 = vpop.f32.mrf.mxu0
    %v202 = vadd.f32 0.0, %v201
    %v203 = vpop.f32.mrf.mxu0
    %204 = vmatprep.mubr.f32.mxu0 0.0
    %205 = vmatmul.mubr.f32.gmra.mxu0 %v103
    %v206 = vpop.f32.mrf.mxu0
    %v207 = vadd.f32 0.0, %v206
    %v208 = vpop.f32.mrf.mxu0
    %209 = vdwg.mxu0
    %210 = vmatprep.subr.mxu0 0.0
    %211 = vmatpush1.msra.mxu0 %v79
    %212 = vmatprep.subr.mxu0 0.0
    %213 = vmatpush1.msra.mxu0 %v78
    %214 = vmatprep.subr.mxu0 0.0
    %215 = vmatpush1.msra.mxu0 %v77
    %216 = vmatprep.subr.mxu0 0.0
    %217 = vmatpush1.msra.mxu0 %v76
    %218 = vmatprep.subr.mxu0 0.0
    %219 = vmatpush1.msra.mxu0 %v75
    %220 = vmatprep.subr.mxu0 0.0
    %221 = vmatpush1.msra.mxu0 %v74
    %222 = vmatprep.subr.mxu0 0.0
    %223 = vmatpush1.msra.mxu0 %v73
    %224 = vmatprep.subr.mxu0 0.0
    %225 = vmatpush1.msra.mxu0 %v72
    %226 = vmatprep.subr.mxu0 0.0
    %227 = vmatpush1.msra.mxu0 %v71
    %228 = vmatprep.subr.mxu0 0.0
    %229 = vmatpush1.msra.mxu0 %v70
    %230 = vmatprep.subr.mxu0 0.0
    %231 = vmatpush1.msra.mxu0 %v69
    %232 = vmatprep.subr.mxu0 0.0
    %233 = vmatpush1.msra.mxu0 %v68
    %234 = vmatprep.subr.mxu0 0.0
    %235 = vmatpush1.msra.mxu0 %v67
    %236 = vmatprep.subr.mxu0 0.0
    %237 = vmatpush1.msra.mxu0 %v66
    %238 = vmatprep.subr.mxu0 0.0
    %239 = vmatpush1.msra.mxu0 %v65
    %240 = vmatprep.subr.mxu0 0.0
    %241 = vmatpush1.msra.mxu0 %v64
    %242 = vmatprep.subr.mxu0 0.0
    %243 = vmatpush2.msra.mxu0 0.0
    %244 = vmatprep.subr.mxu0 0.0
    %245 = vmatpush2.msra.mxu0 0.0
    %246 = vmatprep.subr.mxu0 0.0
    %247 = vmatpush2.msra.mxu0 0.0
    %248 = vmatprep.subr.mxu0 0.0
    %249 = vmatpush2.msra.mxu0 0.0
    %250 = vmatprep.subr.mxu0 0.0
    %251 = vmatpush2.msra.mxu0 0.0
    %252 = vmatprep.subr.mxu0 0.0
    %253 = vmatpush2.msra.mxu0 0.0
    %254 = vmatprep.subr.mxu0 0.0
    %255 = vmatpush2.msra.mxu0 0.0
    %256 = vmatprep.subr.mxu0 0.0
    %257 = vmatpush2.msra.mxu0 0.0
    %258 = vmatprep.subr.mxu0 0.0
    %259 = vmatpush2.msra.mxu0 0.0
    %260 = vmatprep.subr.mxu0 0.0
    %261 = vmatpush2.msra.mxu0 0.0
    %262 = vmatprep.subr.mxu0 0.0
    %263 = vmatpush2.msra.mxu0 0.0
    %264 = vmatprep.subr.mxu0 0.0
    %265 = vmatpush2.msra.mxu0 0.0
    %266 = vmatprep.subr.mxu0 0.0
    %267 = vmatpush2.msra.mxu0 0.0
    %268 = vmatprep.subr.mxu0 0.0
    %269 = vmatpush2.msra.mxu0 0.0
    %270 = vmatprep.subr.mxu0 0.0
    %271 = vmatpush2.msra.mxu0 0.0
    %272 = vmatprep.subr.mxu0 0.0
    %273 = vmatpush2.msra.mxu0 0.0
    %274 = vmatprep.mubr.f32.mxu0 0.0
    %275 = vmatmul.mubr.f32.gmra.mxu0 %v39
    %v276 = vpop.f32.mrf.mxu0
    %v277 = vadd.f32 0.0, %v276
    %v278 = vpop.f32.mrf.mxu0
    %279 = vmatprep.mubr.f32.mxu0 0.0
    %280 = vmatmul.mubr.f32.gmra.mxu0 %v40
    %v281 = vpop.f32.mrf.mxu0
    %v282 = vadd.f32 0.0, %v281
    %v283 = vpop.f32.mrf.mxu0
    %284 = vmatprep.mubr.f32.mxu0 0.0
    %285 = vmatmul.mubr.f32.gmra.mxu0 %v41
    %v286 = vpop.f32.mrf.mxu0
    %v287 = vadd.f32 0.0, %v286
    %v288 = vpop.f32.mrf.mxu0
    %289 = vmatprep.mubr.f32.mxu0 0.0
    %290 = vmatmul.mubr.f32.gmra.mxu0 %v42
    %v291 = vpop.f32.mrf.mxu0
    %v292 = vadd.f32 0.0, %v291
    %v293 = vpop.f32.mrf.mxu0
    %294 = vmatprep.mubr.f32.mxu0 0.0
    %295 = vmatmul.mubr.f32.gmra.mxu0 %v43
    %v296 = vpop.f32.mrf.mxu0
    %v297 = vadd.f32 0.0, %v296
    %v298 = vpop.f32.mrf.mxu0
    %299 = vmatprep.mubr.f32.mxu0 0.0
    %300 = vmatmul.mubr.f32.gmra.mxu0 %v44
    %v301 = vpop.f32.mrf.mxu0
    %v302 = vadd.f32 0.0, %v301
    %v303 = vpop.f32.mrf.mxu0
    %304 = vmatprep.mubr.f32.mxu0 0.0
    %305 = vmatmul.mubr.f32.gmra.mxu0 %v45
    %v306 = vpop.f32.mrf.mxu0
    %v307 = vadd.f32 0.0, %v306
    %v308 = vpop.f32.mrf.mxu0
    %309 = vmatprep.mubr.f32.mxu0 0.0
    %310 = vmatmul.mubr.f32.gmra.mxu0 %v46
    %v311 = vpop.f32.mrf.mxu0
    %v312 = vadd.f32 0.0, %v311
    %v313 = vpop.f32.mrf.mxu0
    %314 = vdwg.mxu0
    %315 = vmatprep.subr.mxu0 0.0
    %316 = vmatpush1.msra.mxu0 %v63
    %317 = vmatprep.subr.mxu0 0.0
    %318 = vmatpush1.msra.mxu0 %v62
    %319 = vmatprep.subr.mxu0 0.0
    %320 = vmatpush1.msra.mxu0 %v61
    %321 = vmatprep.subr.mxu0 0.0
    %322 = vmatpush1.msra.mxu0 %v60
    %323 = vmatprep.subr.mxu0 0.0
    %324 = vmatpush1.msra.mxu0 %v59
    %325 = vmatprep.subr.mxu0 0.0
    %326 = vmatpush1.msra.mxu0 %v58
    %327 = vmatprep.subr.mxu0 0.0
    %328 = vmatpush1.msra.mxu0 %v57
    %329 = vmatprep.subr.mxu0 0.0
    %330 = vmatpush1.msra.mxu0 %v56
    %331 = vmatprep.subr.mxu0 0.0
    %332 = vmatpush1.msra.mxu0 %v55
    %333 = vmatprep.subr.mxu0 0.0
    %334 = vmatpush1.msra.mxu0 %v54
    %335 = vmatprep.subr.mxu0 0.0
    %336 = vmatpush1.msra.mxu0 %v53
    %337 = vmatprep.subr.mxu0 0.0
    %338 = vmatpush1.msra.mxu0 %v52
    %339 = vmatprep.subr.mxu0 0.0
    %340 = vmatpush1.msra.mxu0 %v51
    %341 = vmatprep.subr.mxu0 0.0
    %342 = vmatpush1.msra.mxu0 %v50
    %343 = vmatprep.subr.mxu0 0.0
    %344 = vmatpush1.msra.mxu0 %v49
    %345 = vmatprep.subr.mxu0 0.0
    %346 = vmatpush1.msra.mxu0 %v48
    %347 = vmatprep.subr.mxu0 0.0
    %348 = vmatpush2.msra.mxu0 0.0
    %349 = vmatprep.subr.mxu0 0.0
    %350 = vmatpush2.msra.mxu0 0.0
    %351 = vmatprep.subr.mxu0 0.0
    %352 = vmatpush2.msra.mxu0 0.0
    %353 = vmatprep.subr.mxu0 0.0
    %354 = vmatpush2.msra.mxu0 0.0
    %355 = vmatprep.subr.mxu0 0.0
    %356 = vmatpush2.msra.mxu0 0.0
    %357 = vmatprep.subr.mxu0 0.0
    %358 = vmatpush2.msra.mxu0 0.0
    %359 = vmatprep.subr.mxu0 0.0
    %360 = vmatpush2.msra.mxu0 0.0
    %361 = vmatprep.subr.mxu0 0.0
    %362 = vmatpush2.msra.mxu0 0.0
    %363 = vmatprep.subr.mxu0 0.0
    %364 = vmatpush2.msra.mxu0 0.0
    %365 = vmatprep.subr.mxu0 0.0
    %366 = vmatpush2.msra.mxu0 0.0
    %367 = vmatprep.subr.mxu0 0.0
    %368 = vmatpush2.msra.mxu0 0.0
    %369 = vmatprep.subr.mxu0 0.0
    %370 = vmatpush2.msra.mxu0 0.0
    %371 = vmatprep.subr.mxu0 0.0
    %372 = vmatpush2.msra.mxu0 0.0
    %373 = vmatprep.subr.mxu0 0.0
    %374 = vmatpush2.msra.mxu0 0.0
    %375 = vmatprep.subr.mxu0 0.0
    %376 = vmatpush2.msra.mxu0 0.0
    %377 = vmatprep.subr.mxu0 0.0
    %378 = vmatpush2.msra.mxu0 0.0
    %379 = vmatprep.mubr.f32.mxu0 0.0
    %380 = vmatmul.mubr.f32.gmra.mxu0 %v172
    %v381 = vpop.f32.mrf.mxu0
    %v382 = vadd.f32 %v277, %v381
    %v383 = vpop.f32.mrf.mxu0
    %384 = vmatprep.mubr.f32.mxu0 0.0
    %385 = vmatmul.mubr.f32.gmra.mxu0 %v177
    %v386 = vpop.f32.mrf.mxu0
    %v387 = vadd.f32 %v282, %v386
    %v388 = vpop.f32.mrf.mxu0
    %389 = vmatprep.mubr.f32.mxu0 0.0
    %390 = vmatmul.mubr.f32.gmra.mxu0 %v182
    %v391 = vpop.f32.mrf.mxu0
    %v392 = vadd.f32 %v287, %v391
    %v393 = vpop.f32.mrf.mxu0
    %394 = vmatprep.mubr.f32.mxu0 0.0
    %395 = vmatmul.mubr.f32.gmra.mxu0 %v187
    %v396 = vpop.f32.mrf.mxu0
    %v397 = vadd.f32 %v292, %v396
    %v398 = vpop.f32.mrf.mxu0
    %399 = vmatprep.mubr.f32.mxu0 0.0
    %400 = vmatmul.mubr.f32.gmra.mxu0 %v192
    %v401 = vpop.f32.mrf.mxu0
    %v402 = vadd.f32 %v297, %v401
    %v403 = vpop.f32.mrf.mxu0
    %404 = vmatprep.mubr.f32.mxu0 0.0
    %405 = vmatmul.mubr.f32.gmra.mxu0 %v197
    %v406 = vpop.f32.mrf.mxu0
    %v407 = vadd.f32 %v302, %v406
    %v408 = vpop.f32.mrf.mxu0
    %409 = vmatprep.mubr.f32.mxu0 0.0
    %410 = vmatmul.mubr.f32.gmra.mxu0 %v202
    %v411 = vpop.f32.mrf.mxu0
    %v412 = vadd.f32 %v307, %v411
    %v413 = vpop.f32.mrf.mxu0
    %414 = vmatprep.mubr.f32.mxu0 0.0
    %415 = vmatmul.mubr.f32.gmra.mxu0 %v207
    %v416 = vpop.f32.mrf.mxu0
    %v417 = vadd.f32 %v312, %v416
    %v418 = vpop.f32.mrf.mxu0
    %419 = vdwg.mxu0
    %v420 = vlaneseq
    %v421 = vshrl.u32 %v420, 7
    %v422 = vsub.s32 0, %v421
    %v423 = vrot.slane %v47, %v422
    %v424 = vadd.f32 %v382, %v423
    %v425 = vadd.f32 %v387, %v423
    %v426 = vadd.f32 %v392, %v423
    %v427 = vadd.f32 %v397, %v423
    %v428 = vadd.f32 %v402, %v423
    %v429 = vadd.f32 %v407, %v423
    %v430 = vadd.f32 %v412, %v423
    %v431 = vadd.f32 %v417, %v423
    %v432 = vadd.f32 %v424, %v425
    %v433 = vadd.f32 %v432, %v426
    %v434 = vadd.f32 %v433, %v427
    %v435 = vadd.f32 %v434, %v428
    %v436 = vadd.f32 %v435, %v429
    %v437 = vadd.f32 %v436, %v430
    %v438 = vadd.f32 %v437, %v431
    %439 = vadd.xlane.f32.xlu0 %v438
    %v440 = vpop.xlane.xlu0 %439
    %v441 = vrot.slane %v440, 4
    %v442 = vadd.f32 %v440, %v441
    %v443 = vrot.slane %v442, 2
    %v444 = vadd.f32 %v442, %v443
    %v445 = vrot.slane %v444, 1
    %v446 = vadd.f32 %v444, %v445
    %s447 = vtos %v446
    %v448 = vmul.f32 %v424, %v424
    %v449 = vmul.f32 %v425, %v425
    %v450 = vmul.f32 %v426, %v426
    %v451 = vmul.f32 %v427, %v427
    %v452 = vmul.f32 %v428, %v428
    %v453 = vmul.f32 %v429, %v429
    %v454 = vmul.f32 %v430, %v430
    %v455 = vmul.f32 %v431, %v431
    %v456 = vadd.f32 %v448, %v449
    %v457 = vadd.f32 %v456, %v450
    %v458 = vadd.f32 %v457, %v451
    %v459 = vadd.f32 %v458, %v452
    %v460 = vadd.f32 %v459, %v453
    %v461 = vadd.f32 %v460, %v454
    %v462 = vadd.f32 %v461, %v455
    %463 = vadd.xlane.f32.xlu0 %v462
    %v464 = vpop.xlane.xlu0 %463
    %v465 = vrot.slane %v464, 4
    %v466 = vadd.f32 %v464, %v465
    %v467 = vrot.slane %v466, 2
    %v468 = vadd.f32 %v466, %v467
    %v469 = vrot.slane %v468, 1
    %v470 = vadd.f32 %v468, %v469
    %s471 = vtos %v470
    %s472 = smul.f32 %s447, 0.00048828125
    %s473 = smul.f32 %s471, 0.00048828125
    %s474 = smul.f32 %s472, %s472
    %s475 = ssub.f32 %s473, %s474
    %v476 = vstv %s475
    %v477 = vrsqrt.pop %v476
    %v478 = vmul.f32 %v476, %v477
    %vm479 = vcmp.eq.f32.partialorder %v476, inf
    %v480 = vsel %vm479, %v476, %v478
    %vm481 = vcmp.eq.f32.partialorder %v476, 0.0
    %v482 = vand.u32 %v476, 2147483648
    %v483 = vsel %vm481, %v482, %v480
    %s484 = vtos %v483
    %s485 = sadd.f32 %s484, 1e-05
    %v486 = vstv %s485
    %v487 = vrcp.pop %v486
    %s488 = vtos %v487
    %v489 = vstv %s472
    %v490 = vsub.f32 %v424, %v489
    %v491 = vsub.f32 %v425, %v489
    %v492 = vsub.f32 %v426, %v489
    %v493 = vsub.f32 %v427, %v489
    %v494 = vsub.f32 %v428, %v489
    %v495 = vsub.f32 %v429, %v489
    %v496 = vsub.f32 %v430, %v489
    %v497 = vsub.f32 %v431, %v489
    %v498 = vstv %s488
    %v499 = vmul.f32 %v490, %v498
    %v500 = vmul.f32 %v491, %v498
    %v501 = vmul.f32 %v492, %v498
    %v502 = vmul.f32 %v493, %v498
    %v503 = vmul.f32 %v494, %v498
    %v504 = vmul.f32 %v495, %v498
    %v505 = vmul.f32 %v496, %v498
    %v506 = vmul.f32 %v497, %v498
    %v507 = vlaneseq
    %v508 = vshrl.u32 %v507, 7
    %v509 = vsub.s32 1, %v508
    %v510 = vrot.slane %v47, %v509
    %v511 = vmul.f32 %v499, %v510
    %v512 = vmul.f32 %v500, %v510
    %v513 = vmul.f32 %v501, %v510
    %v514 = vmul.f32 %v502, %v510
    %v515 = vmul.f32 %v503, %v510
    %v516 = vmul.f32 %v504, %v510
    %v517 = vmul.f32 %v505, %v510
    %v518 = vmul.f32 %v506, %v510
    %v519 = vlaneseq
    %v520 = vshrl.u32 %v519, 7
    %v521 = vsub.s32 2, %v520
    %v522 = vrot.slane %v47, %v521
    %v523 = vadd.f32 %v511, %v522
    %v524 = vadd.f32 %v512, %v522
    %v525 = vadd.f32 %v513, %v522
    %v526 = vadd.f32 %v514, %v522
    %v527 = vadd.f32 %v515, %v522
    %v528 = vadd.f32 %v516, %v522
    %v529 = vadd.f32 %v517, %v522
    %v530 = vadd.f32 %v518, %v522
    %vm531 = vcmp.gt.f32.partialorder %v523, 0.0
    %vm532 = vcmp.gt.f32.partialorder %v524, 0.0
    %vm533 = vcmp.gt.f32.partialorder %v525, 0.0
    %vm534 = vcmp.gt.f32.partialorder %v526, 0.0
    %vm535 = vcmp.gt.f32.partialorder %v527, 0.0
    %vm536 = vcmp.gt.f32.partialorder %v528, 0.0
    %vm537 = vcmp.gt.f32.partialorder %v529, 0.0
    %vm538 = vcmp.gt.f32.partialorder %v530, 0.0
    %v539 = vlaneseq
    %v540 = vshrl.u32 %v539, 7
    %v541 = vsub.s32 3, %v540
    %v542 = vrot.slane %v47, %v541
    %v543 = vmul.f32 %v542, %v523
    %v544 = vmul.f32 %v542, %v524
    %v545 = vmul.f32 %v542, %v525
    %v546 = vmul.f32 %v542, %v526
    %v547 = vmul.f32 %v542, %v527
    %v548 = vmul.f32 %v542, %v528
    %v549 = vmul.f32 %v542, %v529
    %v550 = vmul.f32 %v542, %v530
    %v551 = vsel %vm531, %v523, %v543
    %v552 = vsel %vm532, %v524, %v544
    %v553 = vsel %vm533, %v525, %v545
    %v554 = vsel %vm534, %v526, %v546
    %v555 = vsel %vm535, %v527, %v547
    %v556 = vsel %vm536, %v528, %v548
    %v557 = vsel %vm537, %v529, %v549
    %v558 = vsel %vm538, %v530, %v550
    %v559 = vld [vmem:[#allocation2 + $0x100] sm:$0xff]
    %v560 = vld [vmem:[#allocation2 + $0x108] sm:$0xff]
    %v561 = vld [vmem:[#allocation2 + $0x110] sm:$0xff]
    %v562 = vld [vmem:[#allocation2 + $0x118] sm:$0xff]
    %v563 = vld [vmem:[#allocation2 + $0x120] sm:$0xff]
    %v564 = vld [vmem:[#allocation2 + $0x128] sm:$0xff]
    %v565 = vld [vmem:[#allocation2 + $0x130] sm:$0xff]
    %v566 = vld [vmem:[#allocation2 + $0x138] sm:$0xff]
    %v567 = vld [vmem:[#allocation2 + $0x140] sm:$0xff]
    %v568 = vld [vmem:[#allocation2 + $0x148] sm:$0xff]
    %v569 = vld [vmem:[#allocation2 + $0x150] sm:$0xff]
    %v570 = vld [vmem:[#allocation2 + $0x158] sm:$0xff]
    %v571 = vld [vmem:[#allocation2 + $0x160] sm:$0xff]
    %v572 = vld [vmem:[#allocation2 + $0x168] sm:$0xff]
    %v573 = vld [vmem:[#allocation2 + $0x170] sm:$0xff]
    %v574 = vld [vmem:[#allocation2 + $0x178] sm:$0xff]
    %v575 = vld [vmem:[#allocation2 + $0x180] sm:$0xff]
    %v576 = vld [vmem:[#allocation2 + $0x188] sm:$0xff]
    %v577 = vld [vmem:[#allocation2 + $0x190] sm:$0xff]
    %v578 = vld [vmem:[#allocation2 + $0x198] sm:$0xff]
    %v579 = vld [vmem:[#allocation2 + $0x1a0] sm:$0xff]
    %v580 = vld [vmem:[#allocation2 + $0x1a8] sm:$0xff]
    %v581 = vld [vmem:[#allocation2 + $0x1b0] sm:$0xff]
    %v582 = vld [vmem:[#allocation2 + $0x1b8] sm:$0xff]
    %v583 = vld [vmem:[#allocation2 + $0x1c0] sm:$0xff]
    %v584 = vld [vmem:[#allocation2 + $0x1c8] sm:$0xff]
    %v585 = vld [vmem:[#allocation2 + $0x1d0] sm:$0xff]
    %v586 = vld [vmem:[#allocation2 + $0x1d8] sm:$0xff]
    %v587 = vld [vmem:[#allocation2 + $0x1e0] sm:$0xff]
    %v588 = vld [vmem:[#allocation2 + $0x1e8] sm:$0xff]
    %v589 = vld [vmem:[#allocation2 + $0x1f0] sm:$0xff]
    %v590 = vld [vmem:[#allocation2 + $0x1f8] sm:$0xff]
    %591 = vmatprep.subr.mxu0 0.0
    %592 = vmatpush1.msra.mxu0 0.0
    %593 = vmatprep.subr.mxu0 0.0
    %594 = vmatpush1.msra.mxu0 0.0
    %595 = vmatprep.subr.mxu0 0.0
    %596 = vmatpush1.msra.mxu0 0.0
    %597 = vmatprep.subr.mxu0 0.0
    %598 = vmatpush1.msra.mxu0 0.0
    %599 = vmatprep.subr.mxu0 0.0
    %600 = vmatpush1.msra.mxu0 0.0
    %601 = vmatprep.subr.mxu0 0.0
    %602 = vmatpush1.msra.mxu0 0.0
    %603 = vmatprep.subr.mxu0 0.0
    %604 = vmatpush1.msra.mxu0 0.0
    %605 = vmatprep.subr.mxu0 0.0
    %606 = vmatpush1.msra.mxu0 0.0
    %607 = vmatprep.subr.mxu0 0.0
    %608 = vmatpush1.msra.mxu0 %v558
    %609 = vmatprep.subr.mxu0 0.0
    %610 = vmatpush1.msra.mxu0 %v557
    %611 = vmatprep.subr.mxu0 0.0
    %612 = vmatpush1.msra.mxu0 %v556
    %613 = vmatprep.subr.mxu0 0.0
    %614 = vmatpush1.msra.mxu0 %v555
    %615 = vmatprep.subr.mxu0 0.0
    %616 = vmatpush1.msra.mxu0 %v554
    %617 = vmatprep.subr.mxu0 0.0
    %618 = vmatpush1.msra.mxu0 %v553
    %619 = vmatprep.subr.mxu0 0.0
    %620 = vmatpush1.msra.mxu0 %v552
    %621 = vmatprep.subr.mxu0 0.0
    %622 = vmatpush1.msra.mxu0 %v551
    %623 = vmatprep.subr.mxu0 0.0
    %624 = vmatpush2.msra.mxu0 0.0
    %625 = vmatprep.subr.mxu0 0.0
    %626 = vmatpush2.msra.mxu0 0.0
    %627 = vmatprep.subr.mxu0 0.0
    %628 = vmatpush2.msra.mxu0 0.0
    %629 = vmatprep.subr.mxu0 0.0
    %630 = vmatpush2.msra.mxu0 0.0
    %631 = vmatprep.subr.mxu0 0.0
    %632 = vmatpush2.msra.mxu0 0.0
    %633 = vmatprep.subr.mxu0 0.0
    %634 = vmatpush2.msra.mxu0 0.0
    %635 = vmatprep.subr.mxu0 0.0
    %636 = vmatpush2.msra.mxu0 0.0
    %637 = vmatprep.subr.mxu0 0.0
    %638 = vmatpush2.msra.mxu0 0.0
    %639 = vmatprep.subr.mxu0 0.0
    %640 = vmatpush2.msra.mxu0 0.0
    %641 = vmatprep.subr.mxu0 0.0
    %642 = vmatpush2.msra.mxu0 0.0
    %643 = vmatprep.subr.mxu0 0.0
    %644 = vmatpush2.msra.mxu0 0.0
    %645 = vmatprep.subr.mxu0 0.0
    %646 = vmatpush2.msra.mxu0 0.0
    %647 = vmatprep.subr.mxu0 0.0
    %648 = vmatpush2.msra.mxu0 0.0
    %649 = vmatprep.subr.mxu0 0.0
    %650 = vmatpush2.msra.mxu0 0.0
    %651 = vmatprep.subr.mxu0 0.0
    %652 = vmatpush2.msra.mxu0 0.0
    %653 = vmatprep.subr.mxu0 0.0
    %654 = vmatpush2.msra.mxu0 0.0
    %655 = vmatprep.mubr.f32.mxu0 0.0
    %656 = vmatmul.mubr.f32.gmra.mxu0 %v82
    %v657 = vpop.f32.mrf.mxu0
    %v658 = vadd.f32 0.0, %v657
    %v659 = vpop.f32.mrf.mxu0
    %660 = vmatprep.mubr.f32.mxu0 0.0
    %661 = vmatmul.mubr.f32.gmra.mxu0 %v85
    %v662 = vpop.f32.mrf.mxu0
    %v663 = vadd.f32 0.0, %v662
    %v664 = vpop.f32.mrf.mxu0
    %665 = vmatprep.mubr.f32.mxu0 0.0
    %666 = vmatmul.mubr.f32.gmra.mxu0 %v88
    %v667 = vpop.f32.mrf.mxu0
    %v668 = vadd.f32 0.0, %v667
    %v669 = vpop.f32.mrf.mxu0
    %670 = vmatprep.mubr.f32.mxu0 0.0
    %671 = vmatmul.mubr.f32.gmra.mxu0 %v91
    %v672 = vpop.f32.mrf.mxu0
    %v673 = vadd.f32 0.0, %v672
    %v674 = vpop.f32.mrf.mxu0
    %675 = vmatprep.mubr.f32.mxu0 0.0
    %676 = vmatmul.mubr.f32.gmra.mxu0 %v94
    %v677 = vpop.f32.mrf.mxu0
    %v678 = vadd.f32 0.0, %v677
    %v679 = vpop.f32.mrf.mxu0
    %680 = vmatprep.mubr.f32.mxu0 0.0
    %681 = vmatmul.mubr.f32.gmra.mxu0 %v97
    %v682 = vpop.f32.mrf.mxu0
    %v683 = vadd.f32 0.0, %v682
    %v684 = vpop.f32.mrf.mxu0
    %685 = vmatprep.mubr.f32.mxu0 0.0
    %686 = vmatmul.mubr.f32.gmra.mxu0 %v100
    %v687 = vpop.f32.mrf.mxu0
    %v688 = vadd.f32 0.0, %v687
    %v689 = vpop.f32.mrf.mxu0
    %690 = vmatprep.mubr.f32.mxu0 0.0
    %691 = vmatmul.mubr.f32.gmra.mxu0 %v103
    %v692 = vpop.f32.mrf.mxu0
    %v693 = vadd.f32 0.0, %v692
    %v694 = vpop.f32.mrf.mxu0
    %695 = vdwg.mxu0
    %696 = vmatprep.subr.mxu0 0.0
    %697 = vmatpush1.msra.mxu0 %v590
    %698 = vmatprep.subr.mxu0 0.0
    %699 = vmatpush1.msra.mxu0 %v589
    %700 = vmatprep.subr.mxu0 0.0
    %701 = vmatpush1.msra.mxu0 %v588
    %702 = vmatprep.subr.mxu0 0.0
    %703 = vmatpush1.msra.mxu0 %v587
    %704 = vmatprep.subr.mxu0 0.0
    %705 = vmatpush1.msra.mxu0 %v586
    %706 = vmatprep.subr.mxu0 0.0
    %707 = vmatpush1.msra.mxu0 %v585
    %708 = vmatprep.subr.mxu0 0.0
    %709 = vmatpush1.msra.mxu0 %v584
    %710 = vmatprep.subr.mxu0 0.0
    %711 = vmatpush1.msra.mxu0 %v583
    %712 = vmatprep.subr.mxu0 0.0
    %713 = vmatpush1.msra.mxu0 %v582
    %714 = vmatprep.subr.mxu0 0.0
    %715 = vmatpush1.msra.mxu0 %v581
    %716 = vmatprep.subr.mxu0 0.0
    %717 = vmatpush1.msra.mxu0 %v580
    %718 = vmatprep.subr.mxu0 0.0
    %719 = vmatpush1.msra.mxu0 %v579
    %720 = vmatprep.subr.mxu0 0.0
    %721 = vmatpush1.msra.mxu0 %v578
    %722 = vmatprep.subr.mxu0 0.0
    %723 = vmatpush1.msra.mxu0 %v577
    %724 = vmatprep.subr.mxu0 0.0
    %725 = vmatpush1.msra.mxu0 %v576
    %726 = vmatprep.subr.mxu0 0.0
    %727 = vmatpush1.msra.mxu0 %v575
    %728 = vmatprep.subr.mxu0 0.0
    %729 = vmatpush2.msra.mxu0 0.0
    %730 = vmatprep.subr.mxu0 0.0
    %731 = vmatpush2.msra.mxu0 0.0
    %732 = vmatprep.subr.mxu0 0.0
    %733 = vmatpush2.msra.mxu0 0.0
    %734 = vmatprep.subr.mxu0 0.0
    %735 = vmatpush2.msra.mxu0 0.0
    %736 = vmatprep.subr.mxu0 0.0
    %737 = vmatpush2.msra.mxu0 0.0
    %738 = vmatprep.subr.mxu0 0.0
    %739 = vmatpush2.msra.mxu0 0.0
    %740 = vmatprep.subr.mxu0 0.0
    %741 = vmatpush2.msra.mxu0 0.0
    %742 = vmatprep.subr.mxu0 0.0
    %743 = vmatpush2.msra.mxu0 0.0
    %744 = vmatprep.subr.mxu0 0.0
    %745 = vmatpush2.msra.mxu0 0.0
    %746 = vmatprep.subr.mxu0 0.0
    %747 = vmatpush2.msra.mxu0 0.0
    %748 = vmatprep.subr.mxu0 0.0
    %749 = vmatpush2.msra.mxu0 0.0
    %750 = vmatprep.subr.mxu0 0.0
    %751 = vmatpush2.msra.mxu0 0.0
    %752 = vmatprep.subr.mxu0 0.0
    %753 = vmatpush2.msra.mxu0 0.0
    %754 = vmatprep.subr.mxu0 0.0
    %755 = vmatpush2.msra.mxu0 0.0
    %756 = vmatprep.subr.mxu0 0.0
    %757 = vmatpush2.msra.mxu0 0.0
    %758 = vmatprep.subr.mxu0 0.0
    %759 = vmatpush2.msra.mxu0 0.0
    %760 = vmatprep.mubr.f32.mxu0 0.0
    %761 = vmatmul.mubr.f32.gmra.mxu0 %v551
    %v762 = vpop.f32.mrf.mxu0
    %v763 = vadd.f32 0.0, %v762
    %v764 = vpop.f32.mrf.mxu0
    %765 = vmatprep.mubr.f32.mxu0 0.0
    %766 = vmatmul.mubr.f32.gmra.mxu0 %v552
    %v767 = vpop.f32.mrf.mxu0
    %v768 = vadd.f32 0.0, %v767
    %v769 = vpop.f32.mrf.mxu0
    %770 = vmatprep.mubr.f32.mxu0 0.0
    %771 = vmatmul.mubr.f32.gmra.mxu0 %v553
    %v772 = vpop.f32.mrf.mxu0
    %v773 = vadd.f32 0.0, %v772
    %v774 = vpop.f32.mrf.mxu0
    %775 = vmatprep.mubr.f32.mxu0 0.0
    %776 = vmatmul.mubr.f32.gmra.mxu0 %v554
    %v777 = vpop.f32.mrf.mxu0
    %v778 = vadd.f32 0.0, %v777
    %v779 = vpop.f32.mrf.mxu0
    %780 = vmatprep.mubr.f32.mxu0 0.0
    %781 = vmatmul.mubr.f32.gmra.mxu0 %v555
    %v782 = vpop.f32.mrf.mxu0
    %v783 = vadd.f32 0.0, %v782
    %v784 = vpop.f32.mrf.mxu0
    %785 = vmatprep.mubr.f32.mxu0 0.0
    %786 = vmatmul.mubr.f32.gmra.mxu0 %v556
    %v787 = vpop.f32.mrf.mxu0
    %v788 = vadd.f32 0.0, %v787
    %v789 = vpop.f32.mrf.mxu0
    %790 = vmatprep.mubr.f32.mxu0 0.0
    %791 = vmatmul.mubr.f32.gmra.mxu0 %v557
    %v792 = vpop.f32.mrf.mxu0
    %v793 = vadd.f32 0.0, %v792
    %v794 = vpop.f32.mrf.mxu0
    %795 = vmatprep.mubr.f32.mxu0 0.0
    %796 = vmatmul.mubr.f32.gmra.mxu0 %v558
    %v797 = vpop.f32.mrf.mxu0
    %v798 = vadd.f32 0.0, %v797
    %v799 = vpop.f32.mrf.mxu0
    %800 = vdwg.mxu0
    %801 = vmatprep.subr.mxu0 0.0
    %802 = vmatpush1.msra.mxu0 %v574
    %803 = vmatprep.subr.mxu0 0.0
    %804 = vmatpush1.msra.mxu0 %v573
    %805 = vmatprep.subr.mxu0 0.0
    %806 = vmatpush1.msra.mxu0 %v572
    %807 = vmatprep.subr.mxu0 0.0
    %808 = vmatpush1.msra.mxu0 %v571
    %809 = vmatprep.subr.mxu0 0.0
    %810 = vmatpush1.msra.mxu0 %v570
    %811 = vmatprep.subr.mxu0 0.0
    %812 = vmatpush1.msra.mxu0 %v569
    %813 = vmatprep.subr.mxu0 0.0
    %814 = vmatpush1.msra.mxu0 %v568
    %815 = vmatprep.subr.mxu0 0.0
    %816 = vmatpush1.msra.mxu0 %v567
    %817 = vmatprep.subr.mxu0 0.0
    %818 = vmatpush1.msra.mxu0 %v566
    %819 = vmatprep.subr.mxu0 0.0
    %820 = vmatpush1.msra.mxu0 %v565
    %821 = vmatprep.subr.mxu0 0.0
    %822 = vmatpush1.msra.mxu0 %v564
    %823 = vmatprep.subr.mxu0 0.0
    %824 = vmatpush1.msra.mxu0 %v563
    %825 = vmatprep.subr.mxu0 0.0
    %826 = vmatpush1.msra.mxu0 %v562
    %827 = vmatprep.subr.mxu0 0.0
    %828 = vmatpush1.msra.mxu0 %v561
    %829 = vmatprep.subr.mxu0 0.0
    %830 = vmatpush1.msra.mxu0 %v560
    %831 = vmatprep.subr.mxu0 0.0
    %832 = vmatpush1.msra.mxu0 %v559
    %833 = vmatprep.subr.mxu0 0.0
    %834 = vmatpush2.msra.mxu0 0.0
    %835 = vmatprep.subr.mxu0 0.0
    %836 = vmatpush2.msra.mxu0 0.0
    %837 = vmatprep.subr.mxu0 0.0
    %838 = vmatpush2.msra.mxu0 0.0
    %839 = vmatprep.subr.mxu0 0.0
    %840 = vmatpush2.msra.mxu0 0.0
    %841 = vmatprep.subr.mxu0 0.0
    %842 = vmatpush2.msra.mxu0 0.0
    %843 = vmatprep.subr.mxu0 0.0
    %844 = vmatpush2.msra.mxu0 0.0
    %845 = vmatprep.subr.mxu0 0.0
    %846 = vmatpush2.msra.mxu0 0.0
    %847 = vmatprep.subr.mxu0 0.0
    %848 = vmatpush2.msra.mxu0 0.0
    %849 = vmatprep.subr.mxu0 0.0
    %850 = vmatpush2.msra.mxu0 0.0
    %851 = vmatprep.subr.mxu0 0.0
    %852 = vmatpush2.msra.mxu0 0.0
    %853 = vmatprep.subr.mxu0 0.0
    %854 = vmatpush2.msra.mxu0 0.0
    %855 = vmatprep.subr.mxu0 0.0
    %856 = vmatpush2.msra.mxu0 0.0
    %857 = vmatprep.subr.mxu0 0.0
    %858 = vmatpush2.msra.mxu0 0.0
    %859 = vmatprep.subr.mxu0 0.0
    %860 = vmatpush2.msra.mxu0 0.0
    %861 = vmatprep.subr.mxu0 0.0
    %862 = vmatpush2.msra.mxu0 0.0
    %863 = vmatprep.subr.mxu0 0.0
    %864 = vmatpush2.msra.mxu0 0.0
    %865 = vmatprep.mubr.f32.mxu0 0.0
    %866 = vmatmul.mubr.f32.gmra.mxu0 %v658
    %v867 = vpop.f32.mrf.mxu0
    %v868 = vadd.f32 %v763, %v867
    %v869 = vpop.f32.mrf.mxu0
    %870 = vmatprep.mubr.f32.mxu0 0.0
    %871 = vmatmul.mubr.f32.gmra.mxu0 %v663
    %v872 = vpop.f32.mrf.mxu0
    %v873 = vadd.f32 %v768, %v872
    %v874 = vpop.f32.mrf.mxu0
    %875 = vmatprep.mubr.f32.mxu0 0.0
    %876 = vmatmul.mubr.f32.gmra.mxu0 %v668
    %v877 = vpop.f32.mrf.mxu0
    %v878 = vadd.f32 %v773, %v877
    %v879 = vpop.f32.mrf.mxu0
    %880 = vmatprep.mubr.f32.mxu0 0.0
    %881 = vmatmul.mubr.f32.gmra.mxu0 %v673
    %v882 = vpop.f32.mrf.mxu0
    %v883 = vadd.f32 %v778, %v882
    %v884 = vpop.f32.mrf.mxu0
    %885 = vmatprep.mubr.f32.mxu0 0.0
    %886 = vmatmul.mubr.f32.gmra.mxu0 %v678
    %v887 = vpop.f32.mrf.mxu0
    %v888 = vadd.f32 %v783, %v887
    %v889 = vpop.f32.mrf.mxu0
    %890 = vmatprep.mubr.f32.mxu0 0.0
    %891 = vmatmul.mubr.f32.gmra.mxu0 %v683
    %v892 = vpop.f32.mrf.mxu0
    %v893 = vadd.f32 %v788, %v892
    %v894 = vpop.f32.mrf.mxu0
    %895 = vmatprep.mubr.f32.mxu0 0.0
    %896 = vmatmul.mubr.f32.gmra.mxu0 %v688
    %v897 = vpop.f32.mrf.mxu0
    %v898 = vadd.f32 %v793, %v897
    %v899 = vpop.f32.mrf.mxu0
    %900 = vmatprep.mubr.f32.mxu0 0.0
    %901 = vmatmul.mubr.f32.gmra.mxu0 %v693
    %v902 = vpop.f32.mrf.mxu0
    %v903 = vadd.f32 %v798, %v902
    %v904 = vpop.f32.mrf.mxu0
    %905 = vdwg.mxu0
    %v906 = vlaneseq
    %v907 = vshrl.u32 %v906, 7
    %v908 = vsub.s32 4, %v907
    %v909 = vrot.slane %v47, %v908
    %v910 = vadd.f32 %v868, %v909
    %v911 = vadd.f32 %v873, %v909
    %v912 = vadd.f32 %v878, %v909
    %v913 = vadd.f32 %v883, %v909
    %v914 = vadd.f32 %v888, %v909
    %v915 = vadd.f32 %v893, %v909
    %v916 = vadd.f32 %v898, %v909
    %v917 = vadd.f32 %v903, %v909
    %v918 = vadd.f32 %v910, %v911
    %v919 = vadd.f32 %v918, %v912
    %v920 = vadd.f32 %v919, %v913
    %v921 = vadd.f32 %v920, %v914
    %v922 = vadd.f32 %v921, %v915
    %v923 = vadd.f32 %v922, %v916
    %v924 = vadd.f32 %v923, %v917
    %925 = vadd.xlane.f32.xlu0 %v924
    %v926 = vpop.xlane.xlu0 %925
    %v927 = vrot.slane %v926, 4
    %v928 = vadd.f32 %v926, %v927
    %v929 = vrot.slane %v928, 2
    %v930 = vadd.f32 %v928, %v929
    %v931 = vrot.slane %v930, 1
    %v932 = vadd.f32 %v930, %v931
    %s933 = vtos %v932
    %v934 = vmul.f32 %v910, %v910
    %v935 = vmul.f32 %v911, %v911
    %v936 = vmul.f32 %v912, %v912
    %v937 = vmul.f32 %v913, %v913
    %v938 = vmul.f32 %v914, %v914
    %v939 = vmul.f32 %v915, %v915
    %v940 = vmul.f32 %v916, %v916
    %v941 = vmul.f32 %v917, %v917
    %v942 = vadd.f32 %v934, %v935
    %v943 = vadd.f32 %v942, %v936
    %v944 = vadd.f32 %v943, %v937
    %v945 = vadd.f32 %v944, %v938
    %v946 = vadd.f32 %v945, %v939
    %v947 = vadd.f32 %v946, %v940
    %v948 = vadd.f32 %v947, %v941
    %949 = vadd.xlane.f32.xlu0 %v948
    %v950 = vpop.xlane.xlu0 %949
    %v951 = vrot.slane %v950, 4
    %v952 = vadd.f32 %v950, %v951
    %v953 = vrot.slane %v952, 2
    %v954 = vadd.f32 %v952, %v953
    %v955 = vrot.slane %v954, 1
    %v956 = vadd.f32 %v954, %v955
    %s957 = vtos %v956
    %s958 = smul.f32 %s933, 0.00048828125
    %s959 = smul.f32 %s957, 0.00048828125
    %s960 = smul.f32 %s958, %s958
    %s961 = ssub.f32 %s959, %s960
    %v962 = vstv %s961
    %v963 = vrsqrt.pop %v962
    %v964 = vmul.f32 %v962, %v963
    %vm965 = vcmp.eq.f32.partialorder %v962, inf
    %v966 = vsel %vm965, %v962, %v964
    %vm967 = vcmp.eq.f32.partialorder %v962, 0.0
    %v968 = vand.u32 %v962, 2147483648
    %v969 = vsel %vm967, %v968, %v966
    %s970 = vtos %v969
    %s971 = sadd.f32 %s970, 1e-05
    %v972 = vstv %s971
    %v973 = vrcp.pop %v972
    %s974 = vtos %v973
    %v975 = vstv %s958
    %v976 = vsub.f32 %v910, %v975
    %v977 = vsub.f32 %v911, %v975
    %v978 = vsub.f32 %v912, %v975
    %v979 = vsub.f32 %v913, %v975
    %v980 = vsub.f32 %v914, %v975
    %v981 = vsub.f32 %v915, %v975
    %v982 = vsub.f32 %v916, %v975
    %v983 = vsub.f32 %v917, %v975
    %v984 = vstv %s974
    %v985 = vmul.f32 %v976, %v984
    %v986 = vmul.f32 %v977, %v984
    %v987 = vmul.f32 %v978, %v984
    %v988 = vmul.f32 %v979, %v984
    %v989 = vmul.f32 %v980, %v984
    %v990 = vmul.f32 %v981, %v984
    %v991 = vmul.f32 %v982, %v984
    %v992 = vmul.f32 %v983, %v984
    %v993 = vlaneseq
    %v994 = vshrl.u32 %v993, 7
    %v995 = vsub.s32 5, %v994
    %v996 = vrot.slane %v47, %v995
    %v997 = vmul.f32 %v985, %v996
    %v998 = vmul.f32 %v986, %v996
    %v999 = vmul.f32 %v987, %v996
    %v1000 = vmul.f32 %v988, %v996
    %v1001 = vmul.f32 %v989, %v996
    %v1002 = vmul.f32 %v990, %v996
    %v1003 = vmul.f32 %v991, %v996
    %v1004 = vmul.f32 %v992, %v996
    %v1005 = vlaneseq
    %v1006 = vshrl.u32 %v1005, 7
    %v1007 = vsub.s32 6, %v1006
    %v1008 = vrot.slane %v47, %v1007
    %v1009 = vadd.f32 %v997, %v1008
    %v1010 = vadd.f32 %v998, %v1008
    %v1011 = vadd.f32 %v999, %v1008
    %v1012 = vadd.f32 %v1000, %v1008
    %v1013 = vadd.f32 %v1001, %v1008
    %v1014 = vadd.f32 %v1002, %v1008
    %v1015 = vadd.f32 %v1003, %v1008
    %v1016 = vadd.f32 %v1004, %v1008
    %vm1017 = vcmp.gt.f32.partialorder %v1009, 0.0
    %vm1018 = vcmp.gt.f32.partialorder %v1010, 0.0
    %vm1019 = vcmp.gt.f32.partialorder %v1011, 0.0
    %vm1020 = vcmp.gt.f32.partialorder %v1012, 0.0
    %vm1021 = vcmp.gt.f32.partialorder %v1013, 0.0
    %vm1022 = vcmp.gt.f32.partialorder %v1014, 0.0
    %vm1023 = vcmp.gt.f32.partialorder %v1015, 0.0
    %vm1024 = vcmp.gt.f32.partialorder %v1016, 0.0
    %v1025 = vlaneseq
    %v1026 = vshrl.u32 %v1025, 7
    %v1027 = vsub.s32 7, %v1026
    %v1028 = vrot.slane %v47, %v1027
    %v1029 = vmul.f32 %v1028, %v1009
    %v1030 = vmul.f32 %v1028, %v1010
    %v1031 = vmul.f32 %v1028, %v1011
    %v1032 = vmul.f32 %v1028, %v1012
    %v1033 = vmul.f32 %v1028, %v1013
    %v1034 = vmul.f32 %v1028, %v1014
    %v1035 = vmul.f32 %v1028, %v1015
    %v1036 = vmul.f32 %v1028, %v1016
    %v1037 = vsel %vm1017, %v1009, %v1029
    %v1038 = vsel %vm1018, %v1010, %v1030
    %v1039 = vsel %vm1019, %v1011, %v1031
    %v1040 = vsel %vm1020, %v1012, %v1032
    %v1041 = vsel %vm1021, %v1013, %v1033
    %v1042 = vsel %vm1022, %v1014, %v1034
    %v1043 = vsel %vm1023, %v1015, %v1035
    %v1044 = vsel %vm1024, %v1016, %v1036
    %1045 = vst [vmem:[%s4] sm:$0xff] %v1037
    %1046 = vst [vmem:[%s4 + $0x8] sm:$0xff] %v1038
    %1047 = vst [vmem:[%s4 + $0x10] sm:$0xff] %v1039
    %1048 = vst [vmem:[%s4 + $0x18] sm:$0xff] %v1040
    %1049 = vst [vmem:[%s4 + $0x20] sm:$0xff] %v1041
    %1050 = vst [vmem:[%s4 + $0x28] sm:$0xff] %v1042
    %1051 = vst [vmem:[%s4 + $0x30] sm:$0xff] %v1043
    %1052 = vst [vmem:[%s4 + $0x38] sm:$0xff] %v1044
    // Predicated region
    $region22: #{gcn_forward.1} parent=1 // pred_check
      _
    $region23: #{gcn_forward.1} parent=1 // pred_check_branch
      %1054 = sbr.rel (0) target = $region25
    $region24: #{gcn_forward.1} parent=1 // pred_region
      _
    $region25: #{gcn_forward.1} parent=1 // pred_fallthru
      _
    // Predicated region
    $region26: #{gcn_forward.1} parent=1 // pred_check
      _
    $region27: #{gcn_forward.1} parent=1 // pred_check_branch
      %1056 = sbr.rel (0) target = $region29
    $region28: #{gcn_forward.1} parent=1 // pred_region
      _
    $region29: #{gcn_forward.1} parent=1 // pred_fallthru
      _
    %1057 = vsyncpa [#allocation3], 1

</llo_original>
